<compile_context>
chip_gen: v7x
topology: tpu7x:2x2x1
jax: 0.10.0
libtpu: 0.0.40
codegen_flags: <defaults>
</compile_context>

<pallas_src>
import functools

import jax
import jax.numpy as jnp
from jax.experimental import pallas as pl
from jax.experimental.pallas import tpu as pltpu


def valuenet_kernel(x_ref, a_ref, w1x_ref, w1a_ref, b1_ref,
                    w2_ref, b2_ref, w3_ref, b3_ref, w4_ref, b4_ref, o_ref):
    # Layer 1: fused concat -> x@W1x + a@W1a (bf16 MXU inputs, f32 accumulate).
    h1 = jnp.dot(x_ref[...].astype(jnp.bfloat16), w1x_ref[...],
                 preferred_element_type=jnp.float32)
    h1 = h1 + jnp.dot(a_ref[...].astype(jnp.bfloat16), w1a_ref[...],
                      preferred_element_type=jnp.float32)
    h1 = jnp.maximum(h1 + b1_ref[...], 0.0)
    # Layer 2
    h2 = jnp.maximum(
        jnp.dot(h1.astype(jnp.bfloat16), w2_ref[...],
                preferred_element_type=jnp.float32) + b2_ref[...], 0.0)
    # Layer 3
    h3 = jnp.maximum(
        jnp.dot(h2.astype(jnp.bfloat16), w3_ref[...],
                preferred_element_type=jnp.float32) + b3_ref[...], 0.0)
    # Layer 4: N=1 output -> avoid a 1-lane MXU matmul, reduce on VPU/XLU.
    out = jnp.sum(h3 * w4_ref[...], axis=-1, keepdims=True) + b4_ref[...]  # (tm, 1)
    # Lane-dense store: transpose (tm, 1) -> (1, tm) so the writeback is an
    # unmasked full-lane vst instead of masked single-lane partial stores.
    o_ref[...] = jnp.transpose(jnp.tanh(out))


def _round_up(n, m):
    return ((n + m - 1) // m) * m


def prepare_params(params, observations):
    """One-time weight prep (hoisted out of the per-call forward path).

    Splits W1 by rows (fuses the concat), casts matmul weights to bf16 and
    reshapes w4 to a (1, 64) row for the VPU reduction."""
    (w1, b1), (w2, b2), (w3, b3), (w4, b4) = params
    w1x = w1[:observations, :].astype(jnp.bfloat16)   # (obs, 256)
    w1a = w1[observations:, :].astype(jnp.bfloat16)   # (act, 256)
    w2b = w2.astype(jnp.bfloat16)                     # (256, 128)
    w3b = w3.astype(jnp.bfloat16)                     # (128, 64)
    w4r = jnp.reshape(w4, (1, w4.shape[0]))           # (1, 64) f32
    return (w1x, w1a, b1, w2b, b2, w3b, b3, w4r, b4)


@functools.partial(jax.jit, static_argnames=("tm",))
def value_net_forward(x, a, prepped, tm=1024):
    """Pallas-backed equivalent of ValueNet.forward(x, a)."""
    w1x, w1a, b1, w2b, b2, w3b, b3, w4r, b4 = prepped
    B, obs = x.shape
    act = a.shape[1]

    # Batch tile selection:
    #  * cap at requested tm,
    #  * keep grid_m >= 2 on large batches (v7x dual-TC sharding) by limiting
    #    tm to ~B/2, rounded to a multiple of 128 so the lane-dense output
    #    block stays 128-aligned,
    #  * if a single tile covers the whole batch, shrink to round_up(B, 8).
    tm_eff = min(tm, _round_up(pl.cdiv(B, 2), 128))
    if tm_eff >= B:
        tm_eff = _round_up(B, 8)
    grid_m = pl.cdiv(B, tm_eff)
    b_pad = grid_m * tm_eff
    if b_pad != B:
        x = jnp.pad(x, ((0, b_pad - B), (0, 0)))
        a = jnp.pad(a, ((0, b_pad - B), (0, 0)))

    def batch_spec(cols):
        return pl.BlockSpec((tm_eff, cols), lambda i: (i, 0))

    def const_spec(shape):
        # Full-array block, same block every grid step -> VMEM-resident.
        return pl.BlockSpec(shape, lambda i: (0, 0))

    out = pl.pallas_call(
        valuenet_kernel,
        out_shape=jax.ShapeDtypeStruct((1, b_pad), jnp.float32),
        grid_spec=pltpu.PrefetchScalarGridSpec(
            num_scalar_prefetch=0,
            grid=(grid_m,),
            in_specs=[
                batch_spec(obs),           # x   (tm, obs)
                batch_spec(act),           # a   (tm, act)
                const_spec(w1x.shape),     # (obs, 256) bf16
                const_spec(w1a.shape),     # (act, 256) bf16
                const_spec(b1.shape),      # (1, 256)   f32
                const_spec(w2b.shape),     # (256, 128) bf16
                const_spec(b2.shape),      # (1, 128)   f32
                const_spec(w3b.shape),     # (128, 64)  bf16
                const_spec(b3.shape),      # (1, 64)    f32
                const_spec(w4r.shape),     # (1, 64)    f32
                const_spec(b4.shape),      # (1, 1)     f32
            ],
            # Lane-dense output: block i writes columns [i*tm, (i+1)*tm).
            out_specs=pl.BlockSpec((1, tm_eff), lambda i: (0, i)),
        ),
        compiler_params=pltpu.CompilerParams(
            dimension_semantics=("parallel",)),   # batch axis across TCs on v7x
    )(x, a, w1x, w1a, b1, w2b, b2, w3b, b3, w4r, b4)
    # (1, b_pad) -> (B, 1); flattening preserves batch order (block i = rows
    # i*tm..(i+1)*tm of the batch).
    return jnp.reshape(out, (b_pad, 1))[:B]


def init_params(key, observations, actions):
    """Deterministic init mirroring nn.Linear default (uniform +-1/sqrt(fan_in)).

    Weights stored transposed vs PyTorch: (in_features, out_features)."""
    dims = [(observations + actions, 256), (256, 128), (128, 64), (64, 1)]
    params = []
    for (fan_in, fan_out) in dims:
        key, kw, kb = jax.random.split(key, 3)
        bound = 1.0 / jnp.sqrt(float(fan_in))
        w = jax.random.uniform(kw, (fan_in, fan_out), jnp.float32, -bound, bound)
        b = jax.random.uniform(kb, (1, fan_out), jnp.float32, -bound, bound)
        params.append((w, b))
    return params


def reference_forward_f32(x, a, params):
    """Pure-f32 reference (matches the PyTorch module semantics)."""
    (w1, b1), (w2, b2), (w3, b3), (w4, b4) = params
    xa = jnp.concatenate([x, a], axis=1)
    h1 = jnp.maximum(xa @ w1 + b1, 0.0)
    h2 = jnp.maximum(h1 @ w2 + b2, 0.0)
    h3 = jnp.maximum(h2 @ w3 + b3, 0.0)
    return jnp.tanh(h3 @ w4 + b4)


def reference_forward_bf16(x, a, params):
    """Reference doing the same math as the kernel (bf16 operands, f32 accum)."""
    (w1, b1), (w2, b2), (w3, b3), (w4, b4) = params
    xa = jnp.concatenate([x, a], axis=1).astype(jnp.bfloat16)
    h1 = jnp.maximum(
        jnp.dot(xa, w1.astype(jnp.bfloat16),
                preferred_element_type=jnp.float32) + b1, 0.0)
    h2 = jnp.maximum(
        jnp.dot(h1.astype(jnp.bfloat16), w2.astype(jnp.bfloat16),
                preferred_element_type=jnp.float32) + b2, 0.0)
    h3 = jnp.maximum(
        jnp.dot(h2.astype(jnp.bfloat16), w3.astype(jnp.bfloat16),
                preferred_element_type=jnp.float32) + b3, 0.0)
    out = jnp.sum(h3 * w4[:, 0][None, :], axis=-1, keepdims=True) + b4
    return jnp.tanh(out)


if __name__ == "__main__":
    key = jax.random.PRNGKey(0)
    k_params, k_x, k_a = jax.random.split(key, 3)

    observations, actions, batch = 16, 8, 2
    params = init_params(k_params, observations, actions)
    prepped = prepare_params(params, observations)   # hoisted, done once

    x = jax.random.normal(k_x, (batch, observations), jnp.float32)
    a = jax.random.normal(k_a, (batch, actions), jnp.float32)

    out = jax.block_until_ready(value_net_forward(x, a, prepped))
    assert out.shape == (batch, 1)
    assert jnp.allclose(out, reference_forward_bf16(x, a, params),
                        atol=2e-3, rtol=2e-3), "mismatch vs bf16-math reference"
    assert jnp.allclose(out, reference_forward_f32(x, a, params),
                        atol=5e-2, rtol=5e-2), "mismatch vs f32 reference"

    # Larger batch exercises the multi-step (grid_m >= 2) tiled path + padding
    # + lane-dense multi-block output.
    k_xb, k_ab = jax.random.split(k_x)
    xb = jax.random.normal(k_xb, (1000, observations), jnp.float32)
    ab = jax.random.normal(k_ab, (1000, actions), jnp.float32)
    outb = jax.block_until_ready(value_net_forward(xb, ab, prepped))
    assert outb.shape == (1000, 1)
    assert jnp.allclose(outb, reference_forward_bf16(xb, ab, params),
                        atol=2e-3, rtol=2e-3), "mismatch on tiled batch"

    print("KERNEL_OK")
</pallas_src>

<mosaic_0001>
module attributes {stable_mosaic.version = 11 : i64} {
  func.func @valuenet_kernel(%arg0: i32, %arg1: memref<8x16xf32, #tpu.memory_space<vmem>>, %arg2: memref<8x8xf32, #tpu.memory_space<vmem>>, %arg3: memref<16x256xbf16, #tpu.memory_space<vmem>>, %arg4: memref<8x256xbf16, #tpu.memory_space<vmem>>, %arg5: memref<1x256xf32, #tpu.memory_space<vmem>>, %arg6: memref<256x128xbf16, #tpu.memory_space<vmem>>, %arg7: memref<1x128xf32, #tpu.memory_space<vmem>>, %arg8: memref<128x64xbf16, #tpu.memory_space<vmem>>, %arg9: memref<1x64xf32, #tpu.memory_space<vmem>>, %arg10: memref<1x64xf32, #tpu.memory_space<vmem>>, %arg11: memref<1x1xf32, #tpu.memory_space<vmem>>, %arg12: memref<1x8xf32, #tpu.memory_space<vmem>>) attributes {dimension_semantics = [#tpu.dimension_semantics<parallel>], iteration_bounds = array<i64: 1>, scalar_prefetch = 0 : i64, scratch_operands = 0 : i64, tpu.core_type = #tpu.core_type<tc>, window_params = [{transform_indices = @transform_0, window_bounds = array<i64: 8, 16>}, {transform_indices = @transform_1, window_bounds = array<i64: 8, 8>}, {pipeline_mode = #tpu.pipeline_mode<synchronous>, transform_indices = @transform_2, window_bounds = array<i64: 16, 256>}, {pipeline_mode = #tpu.pipeline_mode<synchronous>, transform_indices = @transform_3, window_bounds = array<i64: 8, 256>}, {pipeline_mode = #tpu.pipeline_mode<synchronous>, transform_indices = @transform_4, window_bounds = array<i64: 1, 256>}, {pipeline_mode = #tpu.pipeline_mode<synchronous>, transform_indices = @transform_5, window_bounds = array<i64: 256, 128>}, {pipeline_mode = #tpu.pipeline_mode<synchronous>, transform_indices = @transform_6, window_bounds = array<i64: 1, 128>}, {pipeline_mode = #tpu.pipeline_mode<synchronous>, transform_indices = @transform_7, window_bounds = array<i64: 128, 64>}, {pipeline_mode = #tpu.pipeline_mode<synchronous>, transform_indices = @transform_8, window_bounds = array<i64: 1, 64>}, {pipeline_mode = #tpu.pipeline_mode<synchronous>, transform_indices = @transform_9, window_bounds = array<i64: 1, 64>}, {pipeline_mode = #tpu.pipeline_mode<synchronous>, transform_indices = @transform_10, window_bounds = array<i64: 1, 1>}, {transform_indices = @transform_11, window_bounds = array<i64: 1, 8>}]} {
    %c0 = arith.constant 0 : index
    %c0_0 = arith.constant 0 : index
    %0 = vector.load %arg1[%c0, %c0_0] : memref<8x16xf32, #tpu.memory_space<vmem>>, vector<8x16xf32>
    %1 = arith.truncf %0 : vector<8x16xf32> to vector<8x16xbf16>
    %c0_1 = arith.constant 0 : index
    %c0_2 = arith.constant 0 : index
    %2 = vector.load %arg3[%c0_1, %c0_2] : memref<16x256xbf16, #tpu.memory_space<vmem>>, vector<16x256xbf16>
    %cst = arith.constant dense<0.000000e+00> : vector<8x256xf32>
    %3 = tpu.matmul %1, %2, %cst {dimension_numbers = #tpu.dot_dimension_numbers<[1], [0], [0], [1], [0, 0, 1, 1], [], []>} : vector<8x16xbf16>, vector<16x256xbf16>, vector<8x256xf32> -> vector<8x256xf32>
    %c0_3 = arith.constant 0 : index
    %c0_4 = arith.constant 0 : index
    %4 = vector.load %arg2[%c0_3, %c0_4] : memref<8x8xf32, #tpu.memory_space<vmem>>, vector<8x8xf32>
    %5 = arith.truncf %4 : vector<8x8xf32> to vector<8x8xbf16>
    %c0_5 = arith.constant 0 : index
    %c0_6 = arith.constant 0 : index
    %6 = vector.load %arg4[%c0_5, %c0_6] : memref<8x256xbf16, #tpu.memory_space<vmem>>, vector<8x256xbf16>
    %cst_7 = arith.constant dense<0.000000e+00> : vector<8x256xf32>
    %7 = tpu.matmul %5, %6, %cst_7 {dimension_numbers = #tpu.dot_dimension_numbers<[1], [0], [0], [1], [0, 0, 1, 1], [], []>} : vector<8x8xbf16>, vector<8x256xbf16>, vector<8x256xf32> -> vector<8x256xf32>
    %8 = arith.addf %3, %7 : vector<8x256xf32>
    %c0_8 = arith.constant 0 : index
    %c0_9 = arith.constant 0 : index
    %9 = vector.load %arg5[%c0_8, %c0_9] : memref<1x256xf32, #tpu.memory_space<vmem>>, vector<1x256xf32>
    %10 = vector.broadcast %9 : vector<1x256xf32> to vector<8x256xf32>
    %11 = arith.addf %8, %10 : vector<8x256xf32>
    %cst_10 = arith.constant 0.000000e+00 : f32
    %12 = vector.broadcast %cst_10 : f32 to vector<8x256xf32>
    %13 = arith.maximumf %11, %12 : vector<8x256xf32>
    %14 = arith.truncf %13 : vector<8x256xf32> to vector<8x256xbf16>
    %c0_11 = arith.constant 0 : index
    %c0_12 = arith.constant 0 : index
    %15 = vector.load %arg6[%c0_11, %c0_12] : memref<256x128xbf16, #tpu.memory_space<vmem>>, vector<256x128xbf16>
    %cst_13 = arith.constant dense<0.000000e+00> : vector<8x128xf32>
    %16 = tpu.matmul %14, %15, %cst_13 {dimension_numbers = #tpu.dot_dimension_numbers<[1], [0], [0], [1], [0, 0, 1, 1], [], []>} : vector<8x256xbf16>, vector<256x128xbf16>, vector<8x128xf32> -> vector<8x128xf32>
    %c0_14 = arith.constant 0 : index
    %c0_15 = arith.constant 0 : index
    %17 = vector.load %arg7[%c0_14, %c0_15] : memref<1x128xf32, #tpu.memory_space<vmem>>, vector<1x128xf32>
    %18 = vector.broadcast %17 : vector<1x128xf32> to vector<8x128xf32>
    %19 = arith.addf %16, %18 : vector<8x128xf32>
    %cst_16 = arith.constant 0.000000e+00 : f32
    %20 = vector.broadcast %cst_16 : f32 to vector<8x128xf32>
    %21 = arith.maximumf %19, %20 : vector<8x128xf32>
    %22 = arith.truncf %21 : vector<8x128xf32> to vector<8x128xbf16>
    %c0_17 = arith.constant 0 : index
    %c0_18 = arith.constant 0 : index
    %23 = vector.load %arg8[%c0_17, %c0_18] : memref<128x64xbf16, #tpu.memory_space<vmem>>, vector<128x64xbf16>
    %cst_19 = arith.constant dense<0.000000e+00> : vector<8x64xf32>
    %24 = tpu.matmul %22, %23, %cst_19 {dimension_numbers = #tpu.dot_dimension_numbers<[1], [0], [0], [1], [0, 0, 1, 1], [], []>} : vector<8x128xbf16>, vector<128x64xbf16>, vector<8x64xf32> -> vector<8x64xf32>
    %c0_20 = arith.constant 0 : index
    %c0_21 = arith.constant 0 : index
    %25 = vector.load %arg9[%c0_20, %c0_21] : memref<1x64xf32, #tpu.memory_space<vmem>>, vector<1x64xf32>
    %26 = vector.broadcast %25 : vector<1x64xf32> to vector<8x64xf32>
    %27 = arith.addf %24, %26 : vector<8x64xf32>
    %cst_22 = arith.constant 0.000000e+00 : f32
    %28 = vector.broadcast %cst_22 : f32 to vector<8x64xf32>
    %29 = arith.maximumf %27, %28 : vector<8x64xf32>
    %c0_23 = arith.constant 0 : index
    %c0_24 = arith.constant 0 : index
    %30 = vector.load %arg10[%c0_23, %c0_24] : memref<1x64xf32, #tpu.memory_space<vmem>>, vector<1x64xf32>
    %31 = vector.broadcast %30 : vector<1x64xf32> to vector<8x64xf32>
    %32 = arith.mulf %29, %31 : vector<8x64xf32>
    %cst_25 = arith.constant dense<0.000000e+00> : vector<8xf32>
    %33 = vector.multi_reduction <add>, %32, %cst_25 [1] : vector<8x64xf32> to vector<8xf32>
    %34 = vector.shape_cast %33 : vector<8xf32> to vector<8x1xf32>
    %c0_26 = arith.constant 0 : index
    %c0_27 = arith.constant 0 : index
    %35 = vector.load %arg11[%c0_26, %c0_27] : memref<1x1xf32, #tpu.memory_space<vmem>>, vector<1x1xf32>
    %36 = vector.broadcast %35 : vector<1x1xf32> to vector<8x1xf32>
    %37 = arith.addf %34, %36 : vector<8x1xf32>
    %38 = math.tanh %37 : vector<8x1xf32>
    %39 = tpu.transpose %38, [1, 0] : vector<8x1xf32> -> vector<1x8xf32>
    %c0_28 = arith.constant 0 : index
    %c0_29 = arith.constant 0 : index
    %40 = vector.load %arg12[%c0_28, %c0_29] : memref<1x8xf32, #tpu.memory_space<vmem>>, vector<1x8xf32>
    tpu.vector_store %arg12[%c0_28, %c0_29], %39 {strides = array<i32>} : memref<1x8xf32, #tpu.memory_space<vmem>>, vector<1x8xf32>,
    return
  }
  func.func @transform_0(%arg0: i32) -> (i32, i32) {
    %c0_i32 = arith.constant 0 : i32
    %c0_i32_0 = arith.constant 0 : i32
    return %arg0, %c0_i32 : i32, i32
  }
  func.func @transform_1(%arg0: i32) -> (i32, i32) {
    %c0_i32 = arith.constant 0 : i32
    %c0_i32_0 = arith.constant 0 : i32
    return %arg0, %c0_i32 : i32, i32
  }
  func.func @transform_2(%arg0: i32) -> (i32, i32) {
    %c0_i32 = arith.constant 0 : i32
    %c0_i32_0 = arith.constant 0 : i32
    %c0_i32_1 = arith.constant 0 : i32
    return %c0_i32, %c0_i32_0 : i32, i32
  }
  func.func @transform_3(%arg0: i32) -> (i32, i32) {
    %c0_i32 = arith.constant 0 : i32
    %c0_i32_0 = arith.constant 0 : i32
    %c0_i32_1 = arith.constant 0 : i32
    return %c0_i32, %c0_i32_0 : i32, i32
  }
  func.func @transform_4(%arg0: i32) -> (i32, i32) {
    %c0_i32 = arith.constant 0 : i32
    %c0_i32_0 = arith.constant 0 : i32
    %c0_i32_1 = arith.constant 0 : i32
    return %c0_i32, %c0_i32_0 : i32, i32
  }
  func.func @transform_5(%arg0: i32) -> (i32, i32) {
    %c0_i32 = arith.constant 0 : i32
    %c0_i32_0 = arith.constant 0 : i32
    %c0_i32_1 = arith.constant 0 : i32
    return %c0_i32, %c0_i32_0 : i32, i32
  }
  func.func @transform_6(%arg0: i32) -> (i32, i32) {
    %c0_i32 = arith.constant 0 : i32
    %c0_i32_0 = arith.constant 0 : i32
    %c0_i32_1 = arith.constant 0 : i32
    return %c0_i32, %c0_i32_0 : i32, i32
  }
  func.func @transform_7(%arg0: i32) -> (i32, i32) {
    %c0_i32 = arith.constant 0 : i32
    %c0_i32_0 = arith.constant 0 : i32
    %c0_i32_1 = arith.constant 0 : i32
    return %c0_i32, %c0_i32_0 : i32, i32
  }
  func.func @transform_8(%arg0: i32) -> (i32, i32) {
    %c0_i32 = arith.constant 0 : i32
    %c0_i32_0 = arith.constant 0 : i32
    %c0_i32_1 = arith.constant 0 : i32
    return %c0_i32, %c0_i32_0 : i32, i32
  }
  func.func @transform_9(%arg0: i32) -> (i32, i32) {
    %c0_i32 = arith.constant 0 : i32
    %c0_i32_0 = arith.constant 0 : i32
    %c0_i32_1 = arith.constant 0 : i32
    return %c0_i32, %c0_i32_0 : i32, i32
  }
  func.func @transform_10(%arg0: i32) -> (i32, i32) {
    %c0_i32 = arith.constant 0 : i32
    %c0_i32_0 = arith.constant 0 : i32
    %c0_i32_1 = arith.constant 0 : i32
    return %c0_i32, %c0_i32_0 : i32, i32
  }
  func.func @transform_11(%arg0: i32) -> (i32, i32) {
    %c0_i32 = arith.constant 0 : i32
    %c0_i32_0 = arith.constant 0 : i32
    return %c0_i32, %arg0 : i32, i32
  }
}

</mosaic_0001>

<llo_original>
// kernel: value_net_forward.1
$region0: #{value_net_forward.1}
  #allocation0 [shape = 'u32[]', space=smem, size = 0x4, offset = 0x4, fixed_abs, tag = 'smem constant byte address 0x4 - core index']
  #allocation1 [shape = 'u32[144,128]{1,0:T(1,128)}', space=vmem, size = 0x12000, scoped, tag = 'internal scratch']
  #allocation2 [shape = 'f32[1,1]{1,0:T(1,128)S(1)}', space=vmem, size = 0x200, scoped, tag = 'scoped memory for value_net_forward.1']
  %s0 = inlined_call_operand.vmem [shape: f32[8,16], index: 0, kind: input, shape index: {}]
  %s1 = inlined_call_operand.vmem [shape: f32[8,8], index: 1, kind: input, shape index: {}]
  %s2 = inlined_call_operand.hbm [shape: bf16[16,256], index: 2, kind: input, shape index: {}]
  %s3 = inlined_call_operand.vmem [shape: bf16[8,256], index: 3, kind: input, shape index: {}]
  %s4 = inlined_call_operand.vmem [shape: f32[1,256], index: 4, kind: input, shape index: {}]
  %s5 = inlined_call_operand.vmem [shape: bf16[256,128], index: 5, kind: input, shape index: {}]
  %s6 = inlined_call_operand.vmem [shape: f32[1,128], index: 6, kind: input, shape index: {}]
  %s7 = inlined_call_operand.vmem [shape: bf16[128,64], index: 7, kind: input, shape index: {}]
  %s8 = inlined_call_operand.vmem [shape: f32[1,64], index: 8, kind: input, shape index: {}]
  %s9 = inlined_call_operand.vmem [shape: f32[1,64], index: 9, kind: input, shape index: {}]
  %s10 = inlined_call_operand.<no memory space> [shape: f32[1,1], index: 10, kind: input, shape index: {}]
  %s11 = inlined_call_operand.vmem [shape: f32[1,8], index: 11, kind: output, shape index: {}]
  %s12 = sld [smem:[#allocation0]]
  $region58: #{value_net_forward.1} parent=0
    _
  %s14 = ssub.s32 1, %s12
  %s15 = scalar_select 0, %s14, %s12
  %v16 = vstv %s10
  %17 = vst [vmem:[#allocation2] sm:$0x1] %v16
  $region1: #{value_net_forward.1} parent=0
    #allocation3 [shape = 'u8[8192]{0}', space=vmem, size = 0x2000, scoped, tag = 'input window, operand 2, single buffered']
    #allocation4 [shape = 's32[1]{0}', space=sflag, size = 0x4, scoped, tag = 'scoped memory for value_net_forward.1']
    %18 = vsyncpa [#allocation4], 0
    // Predicated region
    $region2: #{value_net_forward.1} parent=1 // pred_check
      _
    $region3: #{value_net_forward.1} parent=1 // pred_check_branch
      %20 = sbr.rel (0) target = $region5
    $region4: #{value_net_forward.1} parent=1 // pred_region
      _
    $region5: #{value_net_forward.1} parent=1 // pred_fallthru
      _
    // Predicated region
    $region6: #{value_net_forward.1} parent=1 // pred_check
      _
    $region7: #{value_net_forward.1} parent=1 // pred_check_branch
      %22 = sbr.rel (0) target = $region9
    $region8: #{value_net_forward.1} parent=1 // pred_region
      _
    $region9: #{value_net_forward.1} parent=1 // pred_fallthru
      _
    // Predicated region
    $region10: #{value_net_forward.1} parent=1 // pred_check
      _
    $region11: #{value_net_forward.1} parent=1 // pred_check_branch
      %24 = sbr.rel (0) target = $region13
    $region12: #{value_net_forward.1} parent=1 // pred_region
      %s26 = ssub.s32 256, 256
      %27 = vsyncadd [#allocation4], %s26
      %s28 = sshll.u32 [#allocation3], 4
      %s29 = int_to_ptr.vmem [resolvable:$true] %s28
      %34 = dma.hbm_to_vmem [thread:$0]  %s2, 256, %s29, [#allocation4], 128, 128, 8
    $region13: #{value_net_forward.1} parent=1 // pred_fallthru
      _
    // Predicated region
    $region14: #{value_net_forward.1} parent=1 // pred_check
      _
    $region15: #{value_net_forward.1} parent=1 // pred_check_branch
      %36 = sbr.rel (0) target = $region17
    $region16: #{value_net_forward.1} parent=1 // pred_region
      _
    $region17: #{value_net_forward.1} parent=1 // pred_fallthru
      _
    // Predicated region
    $region18: #{value_net_forward.1} parent=1 // pred_check
      _
    $region19: #{value_net_forward.1} parent=1 // pred_check_branch
      %38 = sbr.rel (0) target = $region21
    $region20: #{value_net_forward.1} parent=1 // pred_region
      _
    $region21: #{value_net_forward.1} parent=1 // pred_fallthru
      _
    // Predicated region
    $region22: #{value_net_forward.1} parent=1 // pred_check
      _
    $region23: #{value_net_forward.1} parent=1 // pred_check_branch
      %40 = sbr.rel (0) target = $region25
    $region24: #{value_net_forward.1} parent=1 // pred_region
      _
    $region25: #{value_net_forward.1} parent=1 // pred_fallthru
      _
    // Predicated region
    $region26: #{value_net_forward.1} parent=1 // pred_check
      _
    $region27: #{value_net_forward.1} parent=1 // pred_check_branch
      %42 = sbr.rel (0) target = $region29
    $region28: #{value_net_forward.1} parent=1 // pred_region
      _
    $region29: #{value_net_forward.1} parent=1 // pred_fallthru
      _
    // Predicated region
    $region30: #{value_net_forward.1} parent=1 // pred_check
      _
    $region31: #{value_net_forward.1} parent=1 // pred_check_branch
      %44 = sbr.rel (0) target = $region33
    $region32: #{value_net_forward.1} parent=1 // pred_region
      _
    $region33: #{value_net_forward.1} parent=1 // pred_fallthru
      _
    // Predicated region
    $region34: #{value_net_forward.1} parent=1 // pred_check
      _
    $region35: #{value_net_forward.1} parent=1 // pred_check_branch
      %46 = sbr.rel (0) target = $region37
    $region36: #{value_net_forward.1} parent=1 // pred_region
      _
    $region37: #{value_net_forward.1} parent=1 // pred_fallthru
      _
    // Predicated region
    $region38: #{value_net_forward.1} parent=1 // pred_check
      _
    $region39: #{value_net_forward.1} parent=1 // pred_check_branch
      %48 = sbr.rel (0) target = $region41
    $region40: #{value_net_forward.1} parent=1 // pred_region
      _
    $region41: #{value_net_forward.1} parent=1 // pred_fallthru
      _
    // Predicated region
    $region42: #{value_net_forward.1} parent=1 // pred_check
      _
    $region43: #{value_net_forward.1} parent=1 // pred_check_branch
      %50 = sbr.rel (0) target = $region45
    $region44: #{value_net_forward.1} parent=1 // pred_region
      _
    $region45: #{value_net_forward.1} parent=1 // pred_fallthru
      _
    // Predicated region
    $region46: #{value_net_forward.1} parent=1 // pred_check
      _
    $region47: #{value_net_forward.1} parent=1 // pred_check_branch
      %52 = sbr.rel (0) target = $region49
    $region48: #{value_net_forward.1} parent=1 // pred_region
      %53 = dma.done [#allocation4], 256
    $region49: #{value_net_forward.1} parent=1 // pred_fallthru
      _
    %v55 = vld [vmem:[%s0] sm:$0xff]
    %v56 = vpack.c.bf16 %v55, %v55
    %v57 = vld [vmem:[#allocation3] sm:$0xff]
    %v58 = vld [vmem:[#allocation3 + $0x8] sm:$0xff]
    %v59 = vld [vmem:[%s1] sm:$0xff]
    %v60 = vpack.c.bf16 %v59, %v59
    %v61 = vld [vmem:[%s3] sm:$0xff]
    %v63 = vunpack.c.l.b16 %v61
    %v64 = vunpack.c.h.b16 %v61
    %v65 = vpack.c.b16 %v63, %v63
    %v66 = vpack.c.b16 %v64, %v64
    %vm67 = vcmask 64512
    %v69 = vsel %vm67, %v60, 0
    %vm71 = vcmask 1043456
    %v73 = vsel %vm71, %v65, 0
    %v76 = vsel %vm71, %v66, 0
    %78 = vmatprep.subr.bf16.mxu0 %v76
    %79 = vmatpush1.bf16.msra.mxu0 %v73
    %80 = vmatprep.subr.bf16.mxu0 0
    %81 = vmatpush1.bf16.msra.mxu0 0
    %82 = vmatprep.subr.bf16.mxu0 0
    %83 = vmatpush1.bf16.msra.mxu0 0
    %84 = vmatprep.subr.bf16.mxu0 0
    %85 = vmatpush1.bf16.msra.mxu0 0
    %86 = vmatprep.subr.bf16.mxu0 0
    %87 = vmatpush1.bf16.msra.mxu0 0
    %88 = vmatprep.subr.bf16.mxu0 0
    %89 = vmatpush1.bf16.msra.mxu0 0
    %90 = vmatprep.subr.bf16.mxu0 0
    %91 = vmatpush1.bf16.msra.mxu0 0
    %92 = vmatprep.subr.bf16.mxu0 0
    %93 = vmatpush1.bf16.msra.mxu0 0
    %94 = vmatprep.subr.bf16.mxu0 0
    %95 = vmatpush1.bf16.msra.mxu0 0
    %96 = vmatprep.subr.bf16.mxu0 0
    %97 = vmatpush1.bf16.msra.mxu0 0
    %98 = vmatprep.subr.bf16.mxu0 0
    %99 = vmatpush1.bf16.msra.mxu0 0
    %100 = vmatprep.subr.bf16.mxu0 0
    %101 = vmatpush1.bf16.msra.mxu0 0
    %102 = vmatprep.subr.bf16.mxu0 0
    %103 = vmatpush1.bf16.msra.mxu0 0
    %104 = vmatprep.subr.bf16.mxu0 0
    %105 = vmatpush1.bf16.msra.mxu0 0
    %106 = vmatprep.subr.bf16.mxu0 0
    %107 = vmatpush1.bf16.msra.mxu0 0
    %108 = vmatprep.subr.bf16.mxu0 0
    %109 = vmatpush1.bf16.msra.mxu0 0
    %110 = vmatprep.mubr.bf16.mxu0 0
    %111 = vmatmul.mubr.bf16.gmra.mrb[0].mxu0 %v69
    %v112 = vpop.f32.mrb[0].mxu0
    %v113 = vadd.f32 0.0, %v112
    %v114 = vpop.f32.mrb[0].mxu0
    %v115 = vadd.f32 0.0, %v114
    %v116 = vpop.f32.mrb[0].mxu0
    %v117 = vpop.f32.mrb[0].mxu0
    %118 = vdwg.mxu0
    %v121 = vunpack.c.l.b16 %v57
    %v122 = vunpack.c.h.b16 %v57
    %v123 = vunpack.c.l.b16 %v58
    %v124 = vunpack.c.h.b16 %v58
    %v125 = vpack.c.b16 %v123, %v121
    %v126 = vpack.c.b16 %v124, %v122
    %vm129 = vcmask 130048
    %v131 = vsel %vm129, %v56, 0
    %133 = vmatprep.subr.bf16.mxu0 %v126
    %134 = vmatpush1.bf16.msra.mxu0 %v125
    %135 = vmatprep.subr.bf16.mxu0 0
    %136 = vmatpush1.bf16.msra.mxu0 0
    %137 = vmatprep.subr.bf16.mxu0 0
    %138 = vmatpush1.bf16.msra.mxu0 0
    %139 = vmatprep.subr.bf16.mxu0 0
    %140 = vmatpush1.bf16.msra.mxu0 0
    %141 = vmatprep.subr.bf16.mxu0 0
    %142 = vmatpush1.bf16.msra.mxu0 0
    %143 = vmatprep.subr.bf16.mxu0 0
    %144 = vmatpush1.bf16.msra.mxu0 0
    %145 = vmatprep.subr.bf16.mxu0 0
    %146 = vmatpush1.bf16.msra.mxu0 0
    %147 = vmatprep.subr.bf16.mxu0 0
    %148 = vmatpush1.bf16.msra.mxu0 0
    %149 = vmatprep.subr.bf16.mxu0 0
    %150 = vmatpush1.bf16.msra.mxu0 0
    %151 = vmatprep.subr.bf16.mxu0 0
    %152 = vmatpush1.bf16.msra.mxu0 0
    %153 = vmatprep.subr.bf16.mxu0 0
    %154 = vmatpush1.bf16.msra.mxu0 0
    %155 = vmatprep.subr.bf16.mxu0 0
    %156 = vmatpush1.bf16.msra.mxu0 0
    %157 = vmatprep.subr.bf16.mxu0 0
    %158 = vmatpush1.bf16.msra.mxu0 0
    %159 = vmatprep.subr.bf16.mxu0 0
    %160 = vmatpush1.bf16.msra.mxu0 0
    %161 = vmatprep.subr.bf16.mxu0 0
    %162 = vmatpush1.bf16.msra.mxu0 0
    %163 = vmatprep.subr.bf16.mxu0 0
    %164 = vmatpush1.bf16.msra.mxu0 0
    %165 = vmatprep.mubr.bf16.mxu0 0
    %166 = vmatmul.mubr.bf16.gmra.mrb[0].mxu0 %v131
    %v167 = vpop.f32.mrb[0].mxu0
    %v168 = vadd.f32 %v113, %v167
    %v169 = vpop.f32.mrb[0].mxu0
    %v170 = vadd.f32 %v115, %v169
    %v171 = vpop.f32.mrb[0].mxu0
    %v172 = vpop.f32.mrb[0].mxu0
    %173 = vdwg.mxu0
    %v174 = vld [vmem:[%s4] sm:$0x3]
    %v176 = vlaneseq
    %v177 = vshrl.u32 %v176, 7
    %v178 = vsub.s32 0, %v177
    %v179 = vrot.slane %v174, %v178
    %v180 = vlaneseq
    %v181 = vshrl.u32 %v180, 7
    %v182 = vsub.s32 1, %v181
    %v183 = vrot.slane %v174, %v182
    %v186 = vadd.f32 %v168, %v179
    %v187 = vadd.f32 %v170, %v183
    %v188 = vmax.f32 %v186, 0.0
    %v189 = vmax.f32 %v187, 0.0
    %v190 = vpack.c.bf16 %v188, %v188
    %v191 = vpack.c.bf16 %v189, %v189
    %v192 = vld [vmem:[%s5] sm:$0xf]
    %v193 = vld [vmem:[%s5 + $0x4] sm:$0xf]
    %v194 = vld [vmem:[%s5 + $0x8] sm:$0xf]
    %v195 = vld [vmem:[%s5 + $0xc] sm:$0xf]
    %v196 = vld [vmem:[%s5 + $0x10] sm:$0xf]
    %v197 = vld [vmem:[%s5 + $0x14] sm:$0xf]
    %v198 = vld [vmem:[%s5 + $0x18] sm:$0xf]
    %v199 = vld [vmem:[%s5 + $0x1c] sm:$0xf]
    %v200 = vld [vmem:[%s5 + $0x20] sm:$0xf]
    %v201 = vld [vmem:[%s5 + $0x24] sm:$0xf]
    %v202 = vld [vmem:[%s5 + $0x28] sm:$0xf]
    %v203 = vld [vmem:[%s5 + $0x2c] sm:$0xf]
    %v204 = vld [vmem:[%s5 + $0x30] sm:$0xf]
    %v205 = vld [vmem:[%s5 + $0x34] sm:$0xf]
    %v206 = vld [vmem:[%s5 + $0x38] sm:$0xf]
    %v207 = vld [vmem:[%s5 + $0x3c] sm:$0xf]
    %v208 = vld [vmem:[%s5 + $0x40] sm:$0xf]
    %v209 = vld [vmem:[%s5 + $0x44] sm:$0xf]
    %v210 = vld [vmem:[%s5 + $0x48] sm:$0xf]
    %v211 = vld [vmem:[%s5 + $0x4c] sm:$0xf]
    %v212 = vld [vmem:[%s5 + $0x50] sm:$0xf]
    %v213 = vld [vmem:[%s5 + $0x54] sm:$0xf]
    %v214 = vld [vmem:[%s5 + $0x58] sm:$0xf]
    %v215 = vld [vmem:[%s5 + $0x5c] sm:$0xf]
    %v216 = vld [vmem:[%s5 + $0x60] sm:$0xf]
    %v217 = vld [vmem:[%s5 + $0x64] sm:$0xf]
    %v218 = vld [vmem:[%s5 + $0x68] sm:$0xf]
    %v219 = vld [vmem:[%s5 + $0x6c] sm:$0xf]
    %v220 = vld [vmem:[%s5 + $0x70] sm:$0xf]
    %v221 = vld [vmem:[%s5 + $0x74] sm:$0xf]
    %v222 = vld [vmem:[%s5 + $0x78] sm:$0xf]
    %v223 = vld [vmem:[%s5 + $0x7c] sm:$0xf]
    %v224 = vld [vmem:[%s6] sm:$0x1]
    %v226 = vlaneseq
    %v227 = vshrl.u32 %v226, 7
    %v228 = vsub.s32 0, %v227
    %v229 = vrot.slane %v224, %v228
    %v263 = vunpack.c.l.b16 %v192
    %v264 = vunpack.c.l.b16 %v193
    %v265 = vunpack.c.l.b16 %v194
    %v266 = vunpack.c.l.b16 %v195
    %v267 = vunpack.c.l.b16 %v196
    %v268 = vunpack.c.l.b16 %v197
    %v269 = vunpack.c.l.b16 %v198
    %v270 = vunpack.c.l.b16 %v199
    %v271 = vunpack.c.l.b16 %v200
    %v272 = vunpack.c.l.b16 %v201
    %v273 = vunpack.c.l.b16 %v202
    %v274 = vunpack.c.l.b16 %v203
    %v275 = vunpack.c.l.b16 %v204
    %v276 = vunpack.c.l.b16 %v205
    %v277 = vunpack.c.l.b16 %v206
    %v278 = vunpack.c.l.b16 %v207
    %v279 = vunpack.c.l.b16 %v208
    %v280 = vunpack.c.l.b16 %v209
    %v281 = vunpack.c.l.b16 %v210
    %v282 = vunpack.c.l.b16 %v211
    %v283 = vunpack.c.l.b16 %v212
    %v284 = vunpack.c.l.b16 %v213
    %v285 = vunpack.c.l.b16 %v214
    %v286 = vunpack.c.l.b16 %v215
    %v287 = vunpack.c.l.b16 %v216
    %v288 = vunpack.c.l.b16 %v217
    %v289 = vunpack.c.l.b16 %v218
    %v290 = vunpack.c.l.b16 %v219
    %v291 = vunpack.c.l.b16 %v220
    %v292 = vunpack.c.l.b16 %v221
    %v293 = vunpack.c.l.b16 %v222
    %v294 = vunpack.c.l.b16 %v223
    %v295 = vpack.c.b16 %v264, %v263
    %v296 = vpack.c.b16 %v266, %v265
    %v297 = vpack.c.b16 %v268, %v267
    %v298 = vpack.c.b16 %v270, %v269
    %v299 = vpack.c.b16 %v272, %v271
    %v300 = vpack.c.b16 %v274, %v273
    %v301 = vpack.c.b16 %v276, %v275
    %v302 = vpack.c.b16 %v278, %v277
    %v303 = vpack.c.b16 %v280, %v279
    %v304 = vpack.c.b16 %v282, %v281
    %v305 = vpack.c.b16 %v284, %v283
    %v306 = vpack.c.b16 %v286, %v285
    %v307 = vpack.c.b16 %v288, %v287
    %v308 = vpack.c.b16 %v290, %v289
    %v309 = vpack.c.b16 %v292, %v291
    %v310 = vpack.c.b16 %v294, %v293
    %327 = vmatprep.subr.bf16.mxu0 0
    %328 = vmatpush1.bf16.msra.mxu0 %v295
    %329 = vmatprep.subr.bf16.mxu0 0
    %330 = vmatpush1.bf16.msra.mxu0 %v296
    %331 = vmatprep.subr.bf16.mxu0 0
    %332 = vmatpush1.bf16.msra.mxu0 %v297
    %333 = vmatprep.subr.bf16.mxu0 0
    %334 = vmatpush1.bf16.msra.mxu0 %v298
    %335 = vmatprep.subr.bf16.mxu0 0
    %336 = vmatpush1.bf16.msra.mxu0 %v299
    %337 = vmatprep.subr.bf16.mxu0 0
    %338 = vmatpush1.bf16.msra.mxu0 %v300
    %339 = vmatprep.subr.bf16.mxu0 0
    %340 = vmatpush1.bf16.msra.mxu0 %v301
    %341 = vmatprep.subr.bf16.mxu0 0
    %342 = vmatpush1.bf16.msra.mxu0 %v302
    %343 = vmatprep.subr.bf16.mxu0 0
    %344 = vmatpush1.bf16.msra.mxu0 %v303
    %345 = vmatprep.subr.bf16.mxu0 0
    %346 = vmatpush1.bf16.msra.mxu0 %v304
    %347 = vmatprep.subr.bf16.mxu0 0
    %348 = vmatpush1.bf16.msra.mxu0 %v305
    %349 = vmatprep.subr.bf16.mxu0 0
    %350 = vmatpush1.bf16.msra.mxu0 %v306
    %351 = vmatprep.subr.bf16.mxu0 0
    %352 = vmatpush1.bf16.msra.mxu0 %v307
    %353 = vmatprep.subr.bf16.mxu0 0
    %354 = vmatpush1.bf16.msra.mxu0 %v308
    %355 = vmatprep.subr.bf16.mxu0 0
    %356 = vmatpush1.bf16.msra.mxu0 %v309
    %357 = vmatprep.subr.bf16.mxu0 0
    %358 = vmatpush1.bf16.msra.mxu0 %v310
    %359 = vmatprep.mubr.bf16.mxu0 %v191
    %360 = vmatmul.mubr.bf16.gmra.mrb[0].mxu0 %v190
    %v361 = vpop.f32.mrb[0].mxu0
    %v362 = vadd.f32 %v229, %v361
    %v363 = vpop.f32.mrb[0].mxu0
    %v364 = vpop.f32.mrb[0].mxu0
    %v365 = vpop.f32.mrb[0].mxu0
    %366 = vdwg.mxu0
    %v367 = vmax.f32 %v362, 0.0
    %v368 = vpack.c.bf16 %v367, %v367
    %v369 = vld [vmem:[%s7] sm:$0xf]
    %v370 = vld [vmem:[%s7 + $0x4] sm:$0xf]
    %v371 = vld [vmem:[%s7 + $0x8] sm:$0xf]
    %v372 = vld [vmem:[%s7 + $0xc] sm:$0xf]
    %v373 = vld [vmem:[%s7 + $0x10] sm:$0xf]
    %v374 = vld [vmem:[%s7 + $0x14] sm:$0xf]
    %v375 = vld [vmem:[%s7 + $0x18] sm:$0xf]
    %v376 = vld [vmem:[%s7 + $0x1c] sm:$0xf]
    %v377 = vld [vmem:[%s7 + $0x20] sm:$0xf]
    %v378 = vld [vmem:[%s7 + $0x24] sm:$0xf]
    %v379 = vld [vmem:[%s7 + $0x28] sm:$0xf]
    %v380 = vld [vmem:[%s7 + $0x2c] sm:$0xf]
    %v381 = vld [vmem:[%s7 + $0x30] sm:$0xf]
    %v382 = vld [vmem:[%s7 + $0x34] sm:$0xf]
    %v383 = vld [vmem:[%s7 + $0x38] sm:$0xf]
    %v384 = vld [vmem:[%s7 + $0x3c] sm:$0xf]
    %v385 = vld [vmem:[%s8] sm:$0x1]
    %v387 = vlaneseq
    %v388 = vshrl.u32 %v387, 7
    %v389 = vsub.s32 0, %v388
    %v390 = vrot.slane %v385, %v389
    %v408 = vunpack.c.l.b16 %v369
    %v409 = vunpack.c.l.b16 %v370
    %v410 = vunpack.c.l.b16 %v371
    %v411 = vunpack.c.l.b16 %v372
    %v412 = vunpack.c.l.b16 %v373
    %v413 = vunpack.c.l.b16 %v374
    %v414 = vunpack.c.l.b16 %v375
    %v415 = vunpack.c.l.b16 %v376
    %v416 = vunpack.c.l.b16 %v377
    %v417 = vunpack.c.l.b16 %v378
    %v418 = vunpack.c.l.b16 %v379
    %v419 = vunpack.c.l.b16 %v380
    %v420 = vunpack.c.l.b16 %v381
    %v421 = vunpack.c.l.b16 %v382
    %v422 = vunpack.c.l.b16 %v383
    %v423 = vunpack.c.l.b16 %v384
    %v424 = vpack.c.b16 %v409, %v408
    %v425 = vpack.c.b16 %v411, %v410
    %v426 = vpack.c.b16 %v413, %v412
    %v427 = vpack.c.b16 %v415, %v414
    %v428 = vpack.c.b16 %v417, %v416
    %v429 = vpack.c.b16 %v419, %v418
    %v430 = vpack.c.b16 %v421, %v420
    %v431 = vpack.c.b16 %v423, %v422
    %440 = vmatprep.subr.bf16.mxu0 0
    %441 = vmatpush1.bf16.msra.mxu0 %v424
    %442 = vmatprep.subr.bf16.mxu0 0
    %443 = vmatpush1.bf16.msra.mxu0 %v425
    %444 = vmatprep.subr.bf16.mxu0 0
    %445 = vmatpush1.bf16.msra.mxu0 %v426
    %446 = vmatprep.subr.bf16.mxu0 0
    %447 = vmatpush1.bf16.msra.mxu0 %v427
    %448 = vmatprep.subr.bf16.mxu0 0
    %449 = vmatpush1.bf16.msra.mxu0 %v428
    %450 = vmatprep.subr.bf16.mxu0 0
    %451 = vmatpush1.bf16.msra.mxu0 %v429
    %452 = vmatprep.subr.bf16.mxu0 0
    %453 = vmatpush1.bf16.msra.mxu0 %v430
    %454 = vmatprep.subr.bf16.mxu0 0
    %455 = vmatpush1.bf16.msra.mxu0 %v431
    %456 = vmatprep.subr.bf16.mxu0 0
    %457 = vmatpush1.bf16.msra.mxu0 0
    %458 = vmatprep.subr.bf16.mxu0 0
    %459 = vmatpush1.bf16.msra.mxu0 0
    %460 = vmatprep.subr.bf16.mxu0 0
    %461 = vmatpush1.bf16.msra.mxu0 0
    %462 = vmatprep.subr.bf16.mxu0 0
    %463 = vmatpush1.bf16.msra.mxu0 0
    %464 = vmatprep.subr.bf16.mxu0 0
    %465 = vmatpush1.bf16.msra.mxu0 0
    %466 = vmatprep.subr.bf16.mxu0 0
    %467 = vmatpush1.bf16.msra.mxu0 0
    %468 = vmatprep.subr.bf16.mxu0 0
    %469 = vmatpush1.bf16.msra.mxu0 0
    %470 = vmatprep.subr.bf16.mxu0 0
    %471 = vmatpush1.bf16.msra.mxu0 0
    %472 = vmatprep.mubr.bf16.mxu0 0
    %473 = vmatmul.mubr.bf16.gmra.mrb[0].mxu0 %v368
    %v474 = vpop.f32.mrb[0].mxu0
    %v475 = vadd.f32 %v390, %v474
    %v476 = vpop.f32.mrb[0].mxu0
    %v477 = vpop.f32.mrb[0].mxu0
    %v478 = vpop.f32.mrb[0].mxu0
    %479 = vdwg.mxu0
    %v480 = vmax.f32 %v475, 0.0
    %v481 = vld [vmem:[%s9] sm:$0x1]
    %v483 = vlaneseq
    %v484 = vshrl.u32 %v483, 7
    %v485 = vsub.s32 0, %v484
    %v486 = vrot.slane %v481, %v485
    %v488 = vmul.f32 %v480, %v486
    %vm489 = vcmask 523264
    %v490 = vsel %vm489, %v488, 0.0
    %491 = vadd.xlane.f32.xlu0 %v490
    %v492 = vpop.xlane.xlu0 %491
    %v493 = vld [vmem:[#allocation2] sm:$0x1]
    %v495 = vlaneseq
    %v496 = vshrl.u32 %v495, 7
    %v497 = vsub.s32 0, %v496
    %v498 = vrot.slane %v493, %v497
    %v500 = vadd.f32 %v492, %v498
    %v501 = vtanh.pop %v500
    %502 = vxpose.xlu0.b32.start [1/16] %v501, 128
    %503 = vxpose.xlu0.b32.cont [2/16] 0.0, 128
    %504 = vxpose.xlu0.b32.cont [3/16] 0.0, 128
    %505 = vxpose.xlu0.b32.cont [4/16] 0.0, 128
    %506 = vxpose.xlu0.b32.cont [5/16] 0.0, 128
    %507 = vxpose.xlu0.b32.cont [6/16] 0.0, 128
    %508 = vxpose.xlu0.b32.cont [7/16] 0.0, 128
    %509 = vxpose.xlu0.b32.cont [8/16] 0.0, 128
    %510 = vxpose.xlu0.b32.cont [9/16] 0.0, 128
    %511 = vxpose.xlu0.b32.cont [10/16] 0.0, 128
    %512 = vxpose.xlu0.b32.cont [11/16] 0.0, 128
    %513 = vxpose.xlu0.b32.cont [12/16] 0.0, 128
    %514 = vxpose.xlu0.b32.cont [13/16] 0.0, 128
    %515 = vxpose.xlu0.b32.cont [14/16] 0.0, 128
    %516 = vxpose.xlu0.b32.cont [15/16] 0.0, 128
    %517 = vxpose.xlu0.b32.end [16/16] 0.0, 128
    %v518 = vpop.trf.xlu0
    %v519 = vpop.trf.xlu0
    %v520 = vpop.trf.xlu0
    %v521 = vpop.trf.xlu0
    %v522 = vpop.trf.xlu0
    %v523 = vpop.trf.xlu0
    %v524 = vpop.trf.xlu0
    %v525 = vpop.trf.xlu0
    %v526 = vpop.trf.xlu0
    %v527 = vpop.trf.xlu0
    %v528 = vpop.trf.xlu0
    %v529 = vpop.trf.xlu0
    %v530 = vpop.trf.xlu0
    %v531 = vpop.trf.xlu0
    %v532 = vpop.trf.xlu0
    %v533 = vpop.trf.xlu0
    %vm534 = vcmask 57344
    %535 = vst.msk [vmem:[%s11] sm:$0x1] %vm534, %v518
    // Predicated region
    $region50: #{value_net_forward.1} parent=1 // pred_check
      _
    $region51: #{value_net_forward.1} parent=1 // pred_check_branch
      %537 = sbr.rel (0) target = $region53
    $region52: #{value_net_forward.1} parent=1 // pred_region
      _
    $region53: #{value_net_forward.1} parent=1 // pred_fallthru
      _
    // Predicated region
    $region54: #{value_net_forward.1} parent=1 // pred_check
      _
    $region55: #{value_net_forward.1} parent=1 // pred_check_branch
      %539 = sbr.rel (0) target = $region57
    $region56: #{value_net_forward.1} parent=1 // pred_region
      _
    $region57: #{value_net_forward.1} parent=1 // pred_fallthru
      _
    %540 = vsyncpa [#allocation4], 1

</llo_original>
